<compile_context>
chip_gen: v6e
topology: v6e:2x2x1
jax: 0.10.0
libtpu: 0.0.40
codegen_flags: <defaults>
</compile_context>

<pallas_src>
import functools

import jax
import jax.numpy as jnp
from jax.experimental import pallas as pl
from jax.experimental.pallas import tpu as pltpu


def _channel_attention_kernel(x_ref, w1t_ref, w2t_ref, o_ref,
                              sum_acc, max_acc, p_scr,
                              *, hw_total, tile_hw, tile_b):
    # x_ref:   (tB, C, tHW)   native dtype
    # w1t_ref: (C, C//2)      w2t_ref: (C//2, C)
    # o_ref:   (1, tB, C)
    # sum_acc / max_acc: (tB, C) f32.   p_scr: (2*tB, C) f32.
    s = pl.program_id(1)
    n_s = pl.num_programs(1)

    # ---- init tiny accumulators at the first spatial step ------------------
    @pl.when(s == 0)
    def _():
        sum_acc[...] = jnp.zeros_like(sum_acc)
        max_acc[...] = jnp.full_like(max_acc, -jnp.inf)

    # ---- per-step pooling: lane-reduce the chunk, accumulate (tB, C) -------
    def _accumulate(masked):
        xf = x_ref[...].astype(jnp.float32)       # vreg-level cast, no VMEM trip
        if masked:
            lane = jax.lax.broadcasted_iota(jnp.int32, xf.shape, dimension=2)
            valid = (s * tile_hw + lane) < hw_total
            xs = jnp.where(valid, xf, 0.0)
            xm = jnp.where(valid, xf, -jnp.inf)
        else:
            xs = xf
            xm = xf
        sum_acc[...] = sum_acc[...] + jnp.sum(xs, axis=-1)
        max_acc[...] = jnp.maximum(max_acc[...], jnp.max(xm, axis=-1))

    if hw_total % tile_hw != 0:
        # Only the last spatial step pays for the tail mask.
        @pl.when(s < n_s - 1)
        def _():
            _accumulate(masked=False)

        @pl.when(s == n_s - 1)
        def _():
            _accumulate(masked=True)
    else:
        _accumulate(masked=False)

    # ---- finalize: fused two-branch MLP + sigmoid ---------------------------
    @pl.when(s == n_s - 1)
    def _():
        avg = sum_acc[...] * (1.0 / hw_total)                 # (tB, C) f32
        mx = max_acc[...]                                     # (tB, C) f32

        # Stack avg/max rows -> single fc1 + relu + fc2 pass on the MXU.
        p_scr[0:tile_b, :] = avg
        p_scr[tile_b:2 * tile_b, :] = mx
        p = p_scr[...].astype(w1t_ref.dtype)                  # MXU-native dtype
        h = jnp.maximum(
            jnp.dot(p, w1t_ref[...], preferred_element_type=jnp.float32), 0.0)
        o = jnp.dot(h.astype(w2t_ref.dtype), w2t_ref[...],
                    preferred_element_type=jnp.float32)       # (2*tB, C) f32

        p_scr[...] = o
        out = jax.nn.sigmoid(p_scr[0:tile_b, :] + p_scr[tile_b:2 * tile_b, :])
        o_ref[0, :, :] = out.astype(o_ref.dtype)


def _pick_tile_b(B):
    if B <= 1:
        return 1
    # Largest divisor of B that still leaves >= 2 batch tiles (v7x dual TC),
    # capped so per-block footprint stays modest.
    best = 1
    cap = min(B // 2, 8)
    for cand in range(1, cap + 1):
        if B % cand == 0:
            best = cand
    return best


def _pick_tiles(B, C, HW, itemsize, tile_b=None, tile_hw=None):
    if tile_b is None:
        tile_b = _pick_tile_b(B)
    assert B % tile_b == 0, f"tile_b={tile_b} must divide B={B}"
    if tile_hw is None:
        budget = 6 * 1024 * 1024                       # per pipelined input block
        max_thw = max(128, (budget // max(1, tile_b * C * itemsize)) // 128 * 128)
        if HW <= max_thw:
            tile_hw = HW                               # single full spatial block
        else:
            tile_hw = None
            for cand in range(max_thw, 127, -128):
                if HW % cand == 0:                     # prefer an exact divisor
                    tile_hw = cand
                    break
            if tile_hw is None:
                tile_hw = max_thw                      # tail block masked in-kernel
    else:
        tile_hw = min(tile_hw, HW)
        assert tile_hw == HW or tile_hw % 128 == 0, \
            "tile_hw must equal H*W or be a multiple of 128"
    return tile_b, tile_hw


def channel_attention(x, w1, w2, *, tile_b=None, tile_hw=None):
    """x: (B, C, H, W) NCHW.  w1: (C//2, C, 1, 1).  w2: (C, C//2, 1, 1)."""
    B, C, H, W = x.shape
    Ch = w1.shape[0]                         # C // 2
    HW = H * W
    x3 = x.reshape(B, C, HW)
    w1t = jnp.transpose(w1.reshape(Ch, C))   # (C, C//2)
    w2t = jnp.transpose(w2.reshape(C, Ch))   # (C//2, C)

    tB, tHW = _pick_tiles(B, C, HW, x.dtype.itemsize, tile_b, tile_hw)
    nb = B // tB
    grid = (nb, pl.cdiv(HW, tHW))

    kernel = functools.partial(_channel_attention_kernel,
                               hw_total=HW, tile_hw=tHW, tile_b=tB)

    out = pl.pallas_call(
        kernel,
        out_shape=jax.ShapeDtypeStruct((nb, tB, C), x.dtype),
        grid_spec=pltpu.PrefetchScalarGridSpec(
            num_scalar_prefetch=0,
            grid=grid,
            in_specs=[
                pl.BlockSpec((tB, C, tHW), lambda b, s: (b, 0, s)),
                pl.BlockSpec((C, Ch), lambda b, s: (0, 0)),   # weights resident
                pl.BlockSpec((Ch, C), lambda b, s: (0, 0)),
            ],
            out_specs=pl.BlockSpec((1, tB, C), lambda b, s: (b, 0, 0)),
            scratch_shapes=[
                pltpu.VMEM((tB, C), jnp.float32),        # running sum (lane-reduced)
                pltpu.VMEM((tB, C), jnp.float32),        # running max (lane-reduced)
                pltpu.VMEM((2 * tB, C), jnp.float32),    # stacked MLP operand/result
            ],
        ),
        compiler_params=pltpu.CompilerParams(
            dimension_semantics=("parallel", "arbitrary"),
            vmem_limit_bytes=32 * 1024 * 1024),
    )(x3, w1t, w2t)
    return out.reshape(B, C, 1, 1)


def _reference(x, w1, w2):
    # Pure-JAX reference mirroring the PyTorch forward.
    B, C, H, W = x.shape
    Ch = w1.shape[0]
    w1m = w1.reshape(Ch, C)
    w2m = w2.reshape(C, Ch)
    avg = jnp.mean(x, axis=(2, 3))                      # (B, C)
    mx = jnp.max(x, axis=(2, 3))                        # (B, C)

    def mlp(p):
        return jnp.maximum(p @ w1m.T, 0.0) @ w2m.T

    out = jax.nn.sigmoid(mlp(avg) + mlp(mx))
    return out.reshape(B, C, 1, 1)


if __name__ == "__main__":
    key = jax.random.PRNGKey(0)
    k = jax.random.split(key, 6)

    # Case 1: required small shape; force a multi-step spatial pipeline
    # (HW=256, tile_hw=128 -> 2 reduction steps, 2 batch tiles).
    B, C, H, W = 2, 4, 16, 16
    Ch = C // 2
    x = jax.random.normal(k[0], (B, C, H, W), dtype=jnp.float32)
    w1 = jax.random.normal(k[1], (Ch, C, 1, 1), dtype=jnp.float32) * 0.1
    w2 = jax.random.normal(k[2], (C, Ch, 1, 1), dtype=jnp.float32) * 0.1

    out = jax.block_until_ready(channel_attention(x, w1, w2, tile_hw=128))
    ref = _reference(x, w1, w2)
    assert out.shape == (B, C, 1, 1)
    assert jnp.allclose(out, ref, atol=1e-5, rtol=1e-5)

    # Case 2: spatial size not a multiple of the tile -> exercises the gated
    # masked tail block (HW=600, tile_hw=256 -> 3 steps, last one partial).
    B2, C2, H2, W2 = 2, 8, 20, 30
    Ch2 = C2 // 2
    x2 = jax.random.normal(k[3], (B2, C2, H2, W2), dtype=jnp.float32)
    w1b = jax.random.normal(k[4], (Ch2, C2, 1, 1), dtype=jnp.float32) * 0.1
    w2b = jax.random.normal(k[5], (C2, Ch2, 1, 1), dtype=jnp.float32) * 0.1

    out2 = jax.block_until_ready(channel_attention(x2, w1b, w2b, tile_hw=256))
    ref2 = _reference(x2, w1b, w2b)
    assert out2.shape == (B2, C2, 1, 1)
    assert jnp.allclose(out2, ref2, atol=1e-5, rtol=1e-5)

    print("KERNEL_OK")
</pallas_src>

<mosaic_0001>
module attributes {stable_mosaic.version = 11 : i64} {
  func.func @_channel_attention_kernel(%arg0: i32, %arg1: i32, %arg2: memref<1x4x128xf32, #tpu.memory_space<vmem>>, %arg3: memref<4x2xf32, #tpu.memory_space<vmem>>, %arg4: memref<2x4xf32, #tpu.memory_space<vmem>>, %arg5: memref<1x1x4xf32, #tpu.memory_space<vmem>>, %arg6: memref<1x4xf32, #tpu.memory_space<vmem>>, %arg7: memref<1x4xf32, #tpu.memory_space<vmem>>, %arg8: memref<2x4xf32, #tpu.memory_space<vmem>>) attributes {dimension_semantics = [#tpu.dimension_semantics<parallel>, #tpu.dimension_semantics<arbitrary>], iteration_bounds = array<i64: 2, 2>, scalar_prefetch = 0 : i64, scratch_operands = 3 : i64, tpu.core_type = #tpu.core_type<tc>, window_params = [{transform_indices = @transform_0, window_bounds = array<i64: 1, 4, 128>}, {pipeline_mode = #tpu.pipeline_mode<synchronous>, transform_indices = @transform_1, window_bounds = array<i64: 4, 2>}, {pipeline_mode = #tpu.pipeline_mode<synchronous>, transform_indices = @transform_2, window_bounds = array<i64: 2, 4>}, {transform_indices = @transform_3, window_bounds = array<i64: 1, 1, 4>}]} {
    %c0_i32 = arith.constant 0 : i32
    %0 = arith.cmpi eq, %arg1, %c0_i32 : i32
    %1 = arith.extui %0 : i1 to i32
    %c0_i32_0 = arith.constant 0 : i32
    %2 = arith.cmpi ne, %1, %c0_i32_0 : i32
    scf.if %2 {
      %cst_13 = arith.constant 0.000000e+00 : f32
      %15 = vector.broadcast %cst_13 : f32 to vector<1x4xf32>
      %c0_14 = arith.constant 0 : index
      %c0_15 = arith.constant 0 : index
      %16 = vector.load %arg6[%c0_14, %c0_15] : memref<1x4xf32, #tpu.memory_space<vmem>>, vector<1x4xf32>
      tpu.vector_store %arg6[%c0_14, %c0_15], %15 {strides = array<i32>} : memref<1x4xf32, #tpu.memory_space<vmem>>, vector<1x4xf32>,
      %cst_16 = arith.constant 0xFF800000 : f32
      %17 = vector.broadcast %cst_16 : f32 to vector<1x4xf32>
      %c0_17 = arith.constant 0 : index
      %c0_18 = arith.constant 0 : index
      %18 = vector.load %arg7[%c0_17, %c0_18] : memref<1x4xf32, #tpu.memory_space<vmem>>, vector<1x4xf32>
      tpu.vector_store %arg7[%c0_17, %c0_18], %17 {strides = array<i32>} : memref<1x4xf32, #tpu.memory_space<vmem>>, vector<1x4xf32>,
    } else {
    }
    %c0 = arith.constant 0 : index
    %c0_1 = arith.constant 0 : index
    %c0_2 = arith.constant 0 : index
    %3 = vector.load %arg2[%c0, %c0_1, %c0_2] : memref<1x4x128xf32, #tpu.memory_space<vmem>>, vector<1x4x128xf32>
    %c0_3 = arith.constant 0 : index
    %c0_4 = arith.constant 0 : index
    %4 = vector.load %arg6[%c0_3, %c0_4] : memref<1x4xf32, #tpu.memory_space<vmem>>, vector<1x4xf32>
    %cst = arith.constant dense<0.000000e+00> : vector<1x4xf32>
    %5 = vector.multi_reduction <add>, %3, %cst [2] : vector<1x4x128xf32> to vector<1x4xf32>
    %6 = arith.addf %4, %5 : vector<1x4xf32>
    %c0_5 = arith.constant 0 : index
    %c0_6 = arith.constant 0 : index
    %7 = vector.load %arg6[%c0_5, %c0_6] : memref<1x4xf32, #tpu.memory_space<vmem>>, vector<1x4xf32>
    tpu.vector_store %arg6[%c0_5, %c0_6], %6 {strides = array<i32>} : memref<1x4xf32, #tpu.memory_space<vmem>>, vector<1x4xf32>,
    %c0_7 = arith.constant 0 : index
    %c0_8 = arith.constant 0 : index
    %8 = vector.load %arg7[%c0_7, %c0_8] : memref<1x4xf32, #tpu.memory_space<vmem>>, vector<1x4xf32>
    %cst_9 = arith.constant dense<0xFF800000> : vector<1x4xf32>
    %9 = vector.multi_reduction <maximumf>, %3, %cst_9 [2] : vector<1x4x128xf32> to vector<1x4xf32>
    %10 = arith.maximumf %8, %9 : vector<1x4xf32>
    %c0_10 = arith.constant 0 : index
    %c0_11 = arith.constant 0 : index
    %11 = vector.load %arg7[%c0_10, %c0_11] : memref<1x4xf32, #tpu.memory_space<vmem>>, vector<1x4xf32>
    tpu.vector_store %arg7[%c0_10, %c0_11], %10 {strides = array<i32>} : memref<1x4xf32, #tpu.memory_space<vmem>>, vector<1x4xf32>,
    %c1_i32 = arith.constant 1 : i32
    %12 = arith.cmpi eq, %arg1, %c1_i32 : i32
    %13 = arith.extui %12 : i1 to i32
    %c0_i32_12 = arith.constant 0 : i32
    %14 = arith.cmpi ne, %13, %c0_i32_12 : i32
    scf.if %14 {
      %c0_13 = arith.constant 0 : index
      %c0_14 = arith.constant 0 : index
      %15 = vector.load %arg6[%c0_13, %c0_14] : memref<1x4xf32, #tpu.memory_space<vmem>>, vector<1x4xf32>
      %cst_15 = arith.constant 3.906250e-03 : f32
      %16 = vector.broadcast %cst_15 : f32 to vector<1x4xf32>
      %17 = arith.mulf %15, %16 : vector<1x4xf32>
      %c0_16 = arith.constant 0 : index
      %c0_17 = arith.constant 0 : index
      %18 = vector.load %arg7[%c0_16, %c0_17] : memref<1x4xf32, #tpu.memory_space<vmem>>, vector<1x4xf32>
      %c0_18 = arith.constant 0 : index
      %c0_19 = arith.constant 0 : index
      %19 = vector.load %arg8[%c0_18, %c0_19] : memref<2x4xf32, #tpu.memory_space<vmem>>, vector<1x4xf32>
      tpu.vector_store %arg8[%c0_18, %c0_19], %17 {strides = array<i32>} : memref<2x4xf32, #tpu.memory_space<vmem>>, vector<1x4xf32>,
      %c1 = arith.constant 1 : index
      %c0_20 = arith.constant 0 : index
      %20 = vector.load %arg8[%c1, %c0_20] : memref<2x4xf32, #tpu.memory_space<vmem>>, vector<1x4xf32>
      tpu.vector_store %arg8[%c1, %c0_20], %18 {strides = array<i32>} : memref<2x4xf32, #tpu.memory_space<vmem>>, vector<1x4xf32>,
      %c0_21 = arith.constant 0 : index
      %c0_22 = arith.constant 0 : index
      %21 = vector.load %arg8[%c0_21, %c0_22] : memref<2x4xf32, #tpu.memory_space<vmem>>, vector<2x4xf32>
      %c0_23 = arith.constant 0 : index
      %c0_24 = arith.constant 0 : index
      %22 = vector.load %arg3[%c0_23, %c0_24] : memref<4x2xf32, #tpu.memory_space<vmem>>, vector<4x2xf32>
      %cst_25 = arith.constant dense<0.000000e+00> : vector<2x2xf32>
      %23 = tpu.matmul %21, %22, %cst_25 {dimension_numbers = #tpu.dot_dimension_numbers<[1], [0], [0], [1], [0, 0, 1, 1], [], []>} : vector<2x4xf32>, vector<4x2xf32>, vector<2x2xf32> -> vector<2x2xf32>
      %cst_26 = arith.constant 0.000000e+00 : f32
      %24 = vector.broadcast %cst_26 : f32 to vector<2x2xf32>
      %25 = arith.maximumf %23, %24 : vector<2x2xf32>
      %c0_27 = arith.constant 0 : index
      %c0_28 = arith.constant 0 : index
      %26 = vector.load %arg4[%c0_27, %c0_28] : memref<2x4xf32, #tpu.memory_space<vmem>>, vector<2x4xf32>
      %cst_29 = arith.constant dense<0.000000e+00> : vector<2x4xf32>
      %27 = tpu.matmul %25, %26, %cst_29 {dimension_numbers = #tpu.dot_dimension_numbers<[1], [0], [0], [1], [0, 0, 1, 1], [], []>} : vector<2x2xf32>, vector<2x4xf32>, vector<2x4xf32> -> vector<2x4xf32>
      %c0_30 = arith.constant 0 : index
      %c0_31 = arith.constant 0 : index
      %28 = vector.load %arg8[%c0_30, %c0_31] : memref<2x4xf32, #tpu.memory_space<vmem>>, vector<2x4xf32>
      tpu.vector_store %arg8[%c0_30, %c0_31], %27 {strides = array<i32>} : memref<2x4xf32, #tpu.memory_space<vmem>>, vector<2x4xf32>,
      %c0_32 = arith.constant 0 : index
      %c0_33 = arith.constant 0 : index
      %29 = vector.load %arg8[%c0_32, %c0_33] : memref<2x4xf32, #tpu.memory_space<vmem>>, vector<1x4xf32>
      %c1_34 = arith.constant 1 : index
      %c0_35 = arith.constant 0 : index
      %30 = vector.load %arg8[%c1_34, %c0_35] : memref<2x4xf32, #tpu.memory_space<vmem>>, vector<1x4xf32>
      %31 = arith.addf %29, %30 : vector<1x4xf32>
      %32 = arith.negf %31 : vector<1x4xf32>
      %33 = math.exp %32 : vector<1x4xf32>
      %cst_36 = arith.constant 1.000000e+00 : f32
      %34 = vector.broadcast %cst_36 : f32 to vector<1x4xf32>
      %35 = arith.addf %34, %33 : vector<1x4xf32>
      %36 = arith.divf %34, %35 : vector<1x4xf32>
      %c0_37 = arith.constant 0 : index
      %c0_38 = arith.constant 0 : index
      %c0_39 = arith.constant 0 : index
      %37 = vector.load %arg5[%c0_37, %c0_38, %c0_39] : memref<1x1x4xf32, #tpu.memory_space<vmem>>, vector<1x1x4xf32>
      %38 = vector.shape_cast %37 : vector<1x1x4xf32> to vector<1x4xf32>
      %39 = vector.shape_cast %36 : vector<1x4xf32> to vector<1x1x4xf32>
      tpu.vector_store %arg5[%c0_37, %c0_38, %c0_39], %39 {strides = array<i32>} : memref<1x1x4xf32, #tpu.memory_space<vmem>>, vector<1x1x4xf32>,
    } else {
    }
    return
  }
  func.func @transform_0(%arg0: i32, %arg1: i32) -> (i32, i32, i32) {
    %c0_i32 = arith.constant 0 : i32
    %c0_i32_0 = arith.constant 0 : i32
    return %arg0, %c0_i32, %arg1 : i32, i32, i32
  }
  func.func @transform_1(%arg0: i32, %arg1: i32) -> (i32, i32) {
    %c0_i32 = arith.constant 0 : i32
    %c0_i32_0 = arith.constant 0 : i32
    %c0_i32_1 = arith.constant 0 : i32
    return %c0_i32, %c0_i32_0 : i32, i32
  }
  func.func @transform_2(%arg0: i32, %arg1: i32) -> (i32, i32) {
    %c0_i32 = arith.constant 0 : i32
    %c0_i32_0 = arith.constant 0 : i32
    %c0_i32_1 = arith.constant 0 : i32
    return %c0_i32, %c0_i32_0 : i32, i32
  }
  func.func @transform_3(%arg0: i32, %arg1: i32) -> (i32, i32, i32) {
    %c0_i32 = arith.constant 0 : i32
    %c0_i32_0 = arith.constant 0 : i32
    %c0_i32_1 = arith.constant 0 : i32
    return %arg0, %c0_i32, %c0_i32_0 : i32, i32, i32
  }
}

</mosaic_0001>

<llo_original>
// kernel: tpu_custom_call.1
$region0: #{tpu_custom_call.1}
  #allocation0 [shape = 'u32[]', space=smem, size = 0x4, offset = 0x4, fixed_abs, tag = 'smem constant byte address 0x4 - core index']
  #allocation1 [shape = 'u32[144,128]{1,0:T(1,128)}', space=vmem, size = 0x12000, scoped, tag = 'internal scratch']
  #allocation2 [shape = 'f32[1,4]{1,0:T(1,128)}', space=vmem, size = 0x200, scoped, tag = 'scratch operand']
  #allocation3 [shape = 'f32[1,4]{1,0:T(1,128)}', space=vmem, size = 0x200, scoped, tag = 'scratch operand']
  #allocation4 [shape = 'f32[2,4]{1,0:T(2,128)}', space=vmem, size = 0x400, scoped, tag = 'scratch operand']
  %s0 = inlined_call_operand.hbm [shape: f32[2,4,256], index: 0, kind: input, shape index: {}]
  %s1 = inlined_call_operand.vmem [shape: f32[4,2], index: 1, kind: input, shape index: {}]
  %s2 = inlined_call_operand.vmem [shape: f32[2,4], index: 2, kind: input, shape index: {}]
  %s3 = inlined_call_operand.hbm [shape: f32[2,1,4], index: 3, kind: output, shape index: {}]
  %s4 = sld [smem:[#allocation0]]
  $region57: #{tpu_custom_call.1} parent=0
    _
  %s6 = ssub.s32 1, %s4
  %s7 = scalar_select 0, %s6, %s4
  $region1: #{tpu_custom_call.1} parent=0
    #allocation5 [shape = 'u8[4096]{0}', space=vmem, size = 0x1000, scoped, tag = 'input window, operand 0']
    #allocation6 [shape = 's32[2]{0}', space=sflag, size = 0x8, scoped, tag = 'scoped memory for tpu_custom_call.1']
    #allocation7 [shape = 's32[2]{0}', space=sflag, size = 0x8, scoped, tag = 'scoped memory for tpu_custom_call.1']
    #allocation8 [shape = 'u8[1024]{0}', space=vmem, size = 0x400, scoped, tag = 'output window, operand 0']
    %8 = vsyncpa [#allocation6], 0
    %s9 = scalar_lea.sflag [#allocation6], 1
    %10 = vsyncpa %s9, 0
    %11 = vsyncpa [#allocation7], 0
    %s12 = scalar_lea.sflag [#allocation7], 1
    %13 = vsyncpa %s12, 0
    loop: start=0, step=1, limit=6
    $region2: #{tpu_custom_call.1} parent=1 // loop_pre_header
      _
    $region3: #{tpu_custom_call.1} parent=1 // loop_header
      %s15 = sphi 0, %s19
      %p16 = scmp.ge.s32.totalorder %s15, 6
      %s22 = sphi 0, %s34
      %s23 = sphi 0, %s30
      %s24 = sphi 0, %s22
      %s25 = sphi 0, %s23
      %s26 = sphi 0, %s24
      %s27 = sphi 0, %s25
      %s39 = sphi 0, %s41
      %s42 = sphi 0, %s39
      %s43 = sphi 0, %s42
      %s59 = sphi 0, %s43
      %s63 = sphi 0, %s63
      %s65 = sphi 0, %s63
      %s66 = sphi 0, %s65
      %s80 = sphi 0, %s66
      %s84 = sphi 0, %s84
      %s86 = sphi 0, %s84
      %s87 = sphi 0, %s86
      %s101 = sphi 0, %s87
      %s107 = sphi 0, %s109
      %s110 = sphi 0, %s107
      %s111 = sphi 0, %s110
      %s127 = sphi 0, %s111
    $region4: #{tpu_custom_call.1} parent=1 // loop_header_branch
      %18 = sbr.rel (%p16) target = $region8
    $region5: #{tpu_custom_call.1} parent=1 // loop_body
      %s20 = ssub.s32 %s15, 1
      %s21 = ssub.s32 %s15, 2
      %s28 = sadd.s32 1, %s23
      %p29 = scmp.ge.s32.totalorder %s28, 2
      %s30 = scalar_select %p29, 0, %s28
      %s31 = sadd.s32 1, %s22
      %s32 = scalar_select %p29, %s31, %s22
      %p33 = scmp.ge.s32.totalorder %s32, 2
      %s34 = scalar_select %p33, 0, %s32
      %s35 = ssub.s32 %s22, %s34
      %s36 = ssub.s32 %s23, %s30
      %s37 = sor.u32 %s35, %s36
      %p38 = scmp.eq.s32.totalorder %s37, 0
      %s40 = sadd.s32 %s39, 1
      %s41 = scalar_select %p38, %s39, %s40
      %p44 = pneg %p38
      %p45 = scmp.eq.s32.totalorder %s15, 3
      %p46 = por %p44, %p45
      %p47 = scmp.ne.s32.totalorder %s39, %s42
      %p48 = scmp.eq.s32.totalorder %s15, 0
      %p49 = por %p47, %p48
      %p50 = scmp.ne.s32.totalorder %s39, %s42
      %p51 = scmp.eq.s32.totalorder %s20, 3
      %p52 = por %p50, %p51
      %p53 = scmp.ne.s32.totalorder %s42, %s43
      %p54 = scmp.eq.s32.totalorder %s20, 0
      %p55 = por %p53, %p54
      %p56 = scmp.ne.s32.totalorder %s42, %s43
      %p57 = scmp.eq.s32.totalorder %s21, 3
      %p58 = por %p56, %p57
      %p60 = scmp.ne.s32.totalorder %s43, %s59
      %p61 = scmp.eq.s32.totalorder %s21, 0
      %p62 = por %p60, %p61
      %s64 = sadd.s32 %s63, 1
      %p67 = scmp.eq.s32.totalorder %s15, 3
      %p68 = scmp.ne.s32.totalorder %s63, %s65
      %p69 = scmp.eq.s32.totalorder %s15, 0
      %p70 = por %p68, %p69
      %p71 = scmp.ne.s32.totalorder %s63, %s65
      %p72 = scmp.eq.s32.totalorder %s20, 3
      %p73 = por %p71, %p72
      %p74 = scmp.ne.s32.totalorder %s65, %s66
      %p75 = scmp.eq.s32.totalorder %s20, 0
      %p76 = por %p74, %p75
      %p77 = scmp.ne.s32.totalorder %s65, %s66
      %p78 = scmp.eq.s32.totalorder %s21, 3
      %p79 = por %p77, %p78
      %p81 = scmp.ne.s32.totalorder %s66, %s80
      %p82 = scmp.eq.s32.totalorder %s21, 0
      %p83 = por %p81, %p82
      %s85 = sadd.s32 %s84, 1
      %p88 = scmp.eq.s32.totalorder %s15, 3
      %p89 = scmp.ne.s32.totalorder %s84, %s86
      %p90 = scmp.eq.s32.totalorder %s15, 0
      %p91 = por %p89, %p90
      %p92 = scmp.ne.s32.totalorder %s84, %s86
      %p93 = scmp.eq.s32.totalorder %s20, 3
      %p94 = por %p92, %p93
      %p95 = scmp.ne.s32.totalorder %s86, %s87
      %p96 = scmp.eq.s32.totalorder %s20, 0
      %p97 = por %p95, %p96
      %p98 = scmp.ne.s32.totalorder %s86, %s87
      %p99 = scmp.eq.s32.totalorder %s21, 3
      %p100 = por %p98, %p99
      %p102 = scmp.ne.s32.totalorder %s87, %s101
      %p103 = scmp.eq.s32.totalorder %s21, 0
      %p104 = por %p102, %p103
      %s105 = ssub.s32 %s22, %s34
      %p106 = scmp.eq.s32.totalorder %s105, 0
      %s108 = sadd.s32 %s107, 1
      %s109 = scalar_select %p106, %s107, %s108
      %p112 = pneg %p106
      %p113 = scmp.eq.s32.totalorder %s15, 3
      %p114 = por %p112, %p113
      %p115 = scmp.ne.s32.totalorder %s107, %s110
      %p116 = scmp.eq.s32.totalorder %s15, 0
      %p117 = por %p115, %p116
      %p118 = scmp.ne.s32.totalorder %s107, %s110
      %p119 = scmp.eq.s32.totalorder %s20, 3
      %p120 = por %p118, %p119
      %p121 = scmp.ne.s32.totalorder %s110, %s111
      %p122 = scmp.eq.s32.totalorder %s20, 0
      %p123 = por %p121, %p122
      %p124 = scmp.ne.s32.totalorder %s110, %s111
      %p125 = scmp.eq.s32.totalorder %s21, 3
      %p126 = por %p124, %p125
      %p128 = scmp.ne.s32.totalorder %s111, %s127
      %p129 = scmp.eq.s32.totalorder %s21, 0
      %p130 = por %p128, %p129
      %p131 = scmp.le.s32.totalorder 1, %s15
      %p132 = scmp.lt.s32.totalorder %s15, 5
      %p133 = pnand %p131, %p132
      %p134 = pneg %p133
      // Predicated region
      $region9: #{tpu_custom_call.1} parent=5 // pred_check
        _
      $region10: #{tpu_custom_call.1} parent=5 // pred_check_branch
        %136 = sbr.rel (%p133) target = $region12
      $region11: #{tpu_custom_call.1} parent=5 // pred_region
        %s137 = ssub.s32 %s15, 1
        // Predicated region
        $region13: #{tpu_custom_call.1} parent=11 // pred_check
          %p138 = pneg %p76
        $region14: #{tpu_custom_call.1} parent=11 // pred_check_branch
          %140 = sbr.rel (%p138) target = $region16
        $region15: #{tpu_custom_call.1} parent=11 // pred_region
          _
        $region16: #{tpu_custom_call.1} parent=11 // pred_fallthru
          _
        // Predicated region
        $region17: #{tpu_custom_call.1} parent=11 // pred_check
          %p141 = pneg %p97
        $region18: #{tpu_custom_call.1} parent=11 // pred_check_branch
          %143 = sbr.rel (%p141) target = $region20
        $region19: #{tpu_custom_call.1} parent=11 // pred_region
          _
        $region20: #{tpu_custom_call.1} parent=11 // pred_fallthru
          _
      $region12: #{tpu_custom_call.1} parent=5 // pred_fallthru
        _
      %p144 = scmp.lt.s32.totalorder %s15, 4
      // Predicated region
      $region21: #{tpu_custom_call.1} parent=5 // pred_check
        %p145 = pneg %p144
      $region22: #{tpu_custom_call.1} parent=5 // pred_check_branch
        %147 = sbr.rel (%p145) target = $region24
      $region23: #{tpu_custom_call.1} parent=5 // pred_region
        // Predicated region
        $region25: #{tpu_custom_call.1} parent=23 // pred_check
          %p148 = pneg %p49
        $region26: #{tpu_custom_call.1} parent=23 // pred_check_branch
          %150 = sbr.rel (%p148) target = $region28
        $region27: #{tpu_custom_call.1} parent=23 // pred_region
          %s151 = sand.u32 %s39, 1
          %s152 = scalar_lea.sflag [#allocation6], %s151
          %s153 = sand.u32 %s39, 1
          %s154 = smul.addr %s153, 4
          %s155 = scalar_lea.vmem [#allocation5], %s154
          %s157 = ssub.s32 64, 64
          %158 = vsyncadd %s152, %s157
          %s159 = smul.addr %s22, 2
          %s160 = sadd.s32 %s23, %s159
          %s161 = smul.addr %s160, 64
          %s162 = scalar_lea.hbm %s0, %s161
          %s164 = sshll.u32 %s155, 4
          %s165 = int_to_ptr.vmem [resolvable:$true] %s164
          %167 = dma.hbm_to_vmem [thread:$0]  %s162, 64, %s165, %s152
        $region28: #{tpu_custom_call.1} parent=23 // pred_fallthru
          _
      $region24: #{tpu_custom_call.1} parent=5 // pred_fallthru
        _
      %p168 = scmp.le.s32.totalorder 1, %s15
      %p169 = scmp.lt.s32.totalorder %s15, 5
      %p170 = pnand %p168, %p169
      %p171 = pneg %p170
      // Predicated region
      $region29: #{tpu_custom_call.1} parent=5 // pred_check
        _
      $region30: #{tpu_custom_call.1} parent=5 // pred_check_branch
        %173 = sbr.rel (%p170) target = $region32
      $region31: #{tpu_custom_call.1} parent=5 // pred_region
        %s174 = ssub.s32 %s15, 1
        %s175 = sand.u32 %s42, 1
        %s176 = scalar_lea.sflag [#allocation6], %s175
        %s177 = sand.u32 %s42, 1
        %s178 = smul.addr %s177, 4
        %s179 = scalar_lea.vmem [#allocation5], %s178
        // Predicated region
        $region33: #{tpu_custom_call.1} parent=31 // pred_check
          %p180 = pneg %p55
        $region34: #{tpu_custom_call.1} parent=31 // pred_check_branch
          %182 = sbr.rel (%p180) target = $region36
        $region35: #{tpu_custom_call.1} parent=31 // pred_region
          %183 = dma.done %s176, 64
        $region36: #{tpu_custom_call.1} parent=31 // pred_fallthru
          _
        %s184 = sand.u32 %s42, 1
        %s185 = scalar_lea.sflag [#allocation6], %s184
        %s186 = sand.u32 %s42, 1
        %s187 = smul.addr %s186, 4
        %s188 = scalar_lea.vmem [#allocation5], %s187
        %p189 = pneg %p55
        %p190 = pneg %p52
        %p191 = pneg %p76
        %p192 = pneg %p73
        %p193 = pneg %p97
        %p194 = pneg %p94
        %p195 = pneg %p123
        %p196 = pneg %p120
        %s197 = sand.u32 %s110, 1
        %s198 = scalar_lea.sflag [#allocation7], %s197
        %s199 = sand.u32 %s110, 1
        %s200 = scalar_lea.vmem [#allocation8], %s199
        %p201 = scmp.eq.s32.totalorder %s25, 0
        // Predicated region
        $region37: #{tpu_custom_call.1} parent=31 // pred_check
          %p202 = pneg %p201
        $region38: #{tpu_custom_call.1} parent=31 // pred_check_branch
          %204 = sbr.rel (%p202) target = $region40
        $region39: #{tpu_custom_call.1} parent=31 // pred_region
          %vm205 = vcmask 24576
          %206 = vst.msk [vmem:[#allocation2] sm:$0x1] %vm205, 0.0
          %207 = vst.msk [vmem:[#allocation3] sm:$0x1] %vm205, -inf
        $region40: #{tpu_custom_call.1} parent=31 // pred_fallthru
          _
        %v208 = vld [vmem:[%s179] sm:$0xf]
        %v209 = vld [vmem:[#allocation2] sm:$0x1]
        %vm210 = vcmask 1043456
        %v211 = vsel %vm210, %v208, 0.0
        %212 = vadd.xlane.f32.xlu0 %v211
        %v213 = vpop.xlane.xlu0 %212
        %v215 = vlaneseq
        %v216 = vshrl.u32 %v215, 7
        %v217 = vsub.s32 0, %v216
        %v218 = vrot.slane %v213, %v217
        %v219 = vlaneseq
        %v220 = vshrl.u32 %v219, 7
        %v221 = vsub.s32 1, %v220
        %v222 = vrot.slane %v213, %v221
        %v223 = vlaneseq
        %v224 = vshrl.u32 %v223, 7
        %v225 = vsub.s32 2, %v224
        %v226 = vrot.slane %v213, %v225
        %v227 = vlaneseq
        %v228 = vshrl.u32 %v227, 7
        %v229 = vsub.s32 3, %v228
        %v230 = vrot.slane %v213, %v229
        %v231 = vcombine.low %v218, %v222
        %v232 = vcombine.low %v226, %v230
        %v234 = vunpack.c.l.s4 1966171168
        %v235 = vunpack.c.0.s8 %v234
        %v236 = vlaneseq
        %v237 = vshrl.u32 %v236, 7
        %v238 = vsub.s32 %v235, %v237
        %v239 = vrot.slane %v231, %v238
        %v241 = vunpack.c.l.s4 1966171168
        %v242 = vunpack.c.0.s8 %v241
        %v243 = vlaneseq
        %v244 = vshrl.u32 %v243, 7
        %v245 = vsub.s32 %v242, %v244
        %v246 = vrot.slane %v232, %v245
        %v247 = vcombine.low %v239, %v246
        %v249 = vunpack.c.l.s4 1966171168
        %v250 = vunpack.c.0.s8 %v249
        %v251 = vlaneseq
        %v252 = vshrl.u32 %v251, 7
        %v253 = vsub.s32 %v250, %v252
        %v254 = vrot.slane %v247, %v253
        %255 = vset.pattern.permute.xlu0 0
        %256 = vperm.xlu0 %255, %v254
        %v257 = vpop.permute.xlu0 %256
        %v258 = vlaneseq
        %v259 = vand.u32 %v258, 127
        %v260 = vlaneseq
        %v261 = vshrl.u32 %v260, 7
        %v262 = vsub.s32 %v259, %v261
        %v263 = vrot.slane %v257, %v262
        %v265 = vunpack.c.l.s4 1966171168
        %v266 = vunpack.c.0.s8 %v265
        %v267 = vlaneseq
        %v268 = vshrl.u32 %v267, 7
        %v269 = vsub.s32 %v266, %v268
        %v270 = vrot.slane %v263, %v269
        %v272 = vunpack.c.l.s4 1966171168
        %v273 = vunpack.c.0.s8 %v272
        %v274 = vlaneseq
        %v275 = vshrl.u32 %v274, 7
        %v276 = vsub.s32 %v273, %v275
        %v277 = vrot.slane %v270, %v276
        %v279 = vadd.f32 %v209, %v277
        %vm280 = vcmask 24576
        %281 = vst.msk [vmem:[#allocation2] sm:$0x1] %vm280, %v279
        %v282 = vld [vmem:[#allocation3] sm:$0x1]
        %v283 = vsel %vm210, %v208, -inf
        %284 = vmax.xlane.f32.xlu0 %v283
        %v285 = vpop.xlane.xlu0 %284
        %v287 = vlaneseq
        %v288 = vshrl.u32 %v287, 7
        %v289 = vsub.s32 0, %v288
        %v290 = vrot.slane %v285, %v289
        %v291 = vlaneseq
        %v292 = vshrl.u32 %v291, 7
        %v293 = vsub.s32 1, %v292
        %v294 = vrot.slane %v285, %v293
        %v295 = vlaneseq
        %v296 = vshrl.u32 %v295, 7
        %v297 = vsub.s32 2, %v296
        %v298 = vrot.slane %v285, %v297
        %v299 = vlaneseq
        %v300 = vshrl.u32 %v299, 7
        %v301 = vsub.s32 3, %v300
        %v302 = vrot.slane %v285, %v301
        %v303 = vcombine.low %v290, %v294
        %v304 = vcombine.low %v298, %v302
        %v306 = vunpack.c.l.s4 1966171168
        %v307 = vunpack.c.0.s8 %v306
        %v308 = vlaneseq
        %v309 = vshrl.u32 %v308, 7
        %v310 = vsub.s32 %v307, %v309
        %v311 = vrot.slane %v303, %v310
        %v313 = vunpack.c.l.s4 1966171168
        %v314 = vunpack.c.0.s8 %v313
        %v315 = vlaneseq
        %v316 = vshrl.u32 %v315, 7
        %v317 = vsub.s32 %v314, %v316
        %v318 = vrot.slane %v304, %v317
        %v319 = vcombine.low %v311, %v318
        %v321 = vunpack.c.l.s4 1966171168
        %v322 = vunpack.c.0.s8 %v321
        %v323 = vlaneseq
        %v324 = vshrl.u32 %v323, 7
        %v325 = vsub.s32 %v322, %v324
        %v326 = vrot.slane %v319, %v325
        %327 = vset.pattern.permute.xlu0 0
        %328 = vperm.xlu0 %327, %v326
        %v329 = vpop.permute.xlu0 %328
        %v330 = vlaneseq
        %v331 = vshrl.u32 %v330, 7
        %v332 = vsub.s32 %v259, %v331
        %v333 = vrot.slane %v329, %v332
        %v335 = vunpack.c.l.s4 1966171168
        %v336 = vunpack.c.0.s8 %v335
        %v337 = vlaneseq
        %v338 = vshrl.u32 %v337, 7
        %v339 = vsub.s32 %v336, %v338
        %v340 = vrot.slane %v333, %v339
        %v342 = vunpack.c.l.s4 1966171168
        %v343 = vunpack.c.0.s8 %v342
        %v344 = vlaneseq
        %v345 = vshrl.u32 %v344, 7
        %v346 = vsub.s32 %v343, %v345
        %v347 = vrot.slane %v340, %v346
        %v349 = vmax.f32 %v282, %v347
        %350 = vst.msk [vmem:[#allocation3] sm:$0x1] %vm280, %v349
        %p351 = scmp.eq.s32.totalorder %s25, 1
        // Predicated region
        $region41: #{tpu_custom_call.1} parent=31 // pred_check
          %p352 = pneg %p351
        $region42: #{tpu_custom_call.1} parent=31 // pred_check_branch
          %354 = sbr.rel (%p352) target = $region44
        $region43: #{tpu_custom_call.1} parent=31 // pred_region
          %v355 = vld [vmem:[#allocation2] sm:$0x1]
          %v356 = vmul.f32 %v355, 0.00390625
          %v357 = vld [vmem:[#allocation3] sm:$0x1]
          %358 = vst.msk [vmem:[#allocation4] sm:$0x1] %vm280, %v356
          %359 = vst.msk [vmem:[#allocation4 + $0x1] sm:$0x1] %vm280, %v357
          %v360 = vld [vmem:[#allocation4] sm:$0x3]
          %v361 = vld [vmem:[%s1] sm:$0xf]
          %vm362 = vcmask 31744
          %v364 = vsel %vm362, %v360, 0
          %v367 = vsel %vm210, %v361, 0
          %369 = vmatprep.subr.mxu0 0.0
          %370 = vmatpush1.msra.mxu0 0.0
          %371 = vmatprep.subr.mxu0 0.0
          %372 = vmatpush1.msra.mxu0 0.0
          %373 = vmatprep.subr.mxu0 0.0
          %374 = vmatpush1.msra.mxu0 0.0
          %375 = vmatprep.subr.mxu0 0.0
          %376 = vmatpush1.msra.mxu0 0.0
          %377 = vmatprep.subr.mxu0 0.0
          %378 = vmatpush1.msra.mxu0 0.0
          %379 = vmatprep.subr.mxu0 0.0
          %380 = vmatpush1.msra.mxu0 0.0
          %381 = vmatprep.subr.mxu0 0.0
          %382 = vmatpush1.msra.mxu0 0.0
          %383 = vmatprep.subr.mxu0 0.0
          %384 = vmatpush1.msra.mxu0 0.0
          %385 = vmatprep.subr.mxu0 0.0
          %386 = vmatpush1.msra.mxu0 0.0
          %387 = vmatprep.subr.mxu0 0.0
          %388 = vmatpush1.msra.mxu0 0.0
          %389 = vmatprep.subr.mxu0 0.0
          %390 = vmatpush1.msra.mxu0 0.0
          %391 = vmatprep.subr.mxu0 0.0
          %392 = vmatpush1.msra.mxu0 0.0
          %393 = vmatprep.subr.mxu0 0.0
          %394 = vmatpush1.msra.mxu0 0.0
          %395 = vmatprep.subr.mxu0 0.0
          %396 = vmatpush1.msra.mxu0 0.0
          %397 = vmatprep.subr.mxu0 0.0
          %398 = vmatpush1.msra.mxu0 0.0
          %399 = vmatprep.subr.mxu0 0.0
          %400 = vmatpush1.msra.mxu0 %v367
          %401 = vmatprep.subr.mxu0 0.0
          %402 = vmatpush2.msra.mxu0 0.0
          %403 = vmatprep.subr.mxu0 0.0
          %404 = vmatpush2.msra.mxu0 0.0
          %405 = vmatprep.subr.mxu0 0.0
          %406 = vmatpush2.msra.mxu0 0.0
          %407 = vmatprep.subr.mxu0 0.0
          %408 = vmatpush2.msra.mxu0 0.0
          %409 = vmatprep.subr.mxu0 0.0
          %410 = vmatpush2.msra.mxu0 0.0
          %411 = vmatprep.subr.mxu0 0.0
          %412 = vmatpush2.msra.mxu0 0.0
          %413 = vmatprep.subr.mxu0 0.0
          %414 = vmatpush2.msra.mxu0 0.0
          %415 = vmatprep.subr.mxu0 0.0
          %416 = vmatpush2.msra.mxu0 0.0
          %417 = vmatprep.subr.mxu0 0.0
          %418 = vmatpush2.msra.mxu0 0.0
          %419 = vmatprep.subr.mxu0 0.0
          %420 = vmatpush2.msra.mxu0 0.0
          %421 = vmatprep.subr.mxu0 0.0
          %422 = vmatpush2.msra.mxu0 0.0
          %423 = vmatprep.subr.mxu0 0.0
          %424 = vmatpush2.msra.mxu0 0.0
          %425 = vmatprep.subr.mxu0 0.0
          %426 = vmatpush2.msra.mxu0 0.0
          %427 = vmatprep.subr.mxu0 0.0
          %428 = vmatpush2.msra.mxu0 0.0
          %429 = vmatprep.subr.mxu0 0.0
          %430 = vmatpush2.msra.mxu0 0.0
          %431 = vmatprep.subr.mxu0 0.0
          %432 = vmatpush2.msra.mxu0 0.0
          %433 = vmatprep.mubr.f32.mxu0 0.0
          %434 = vmatmul.mubr.f32.gmra.mxu0 %v364
          %v435 = vpop.f32.mrf.mxu0
          %v436 = vadd.f32 0.0, %v435
          %v437 = vpop.f32.mrf.mxu0
          %438 = vdwg.mxu0
          %v439 = vmax.f32 %v436, 0.0
          %v440 = vld [vmem:[%s2] sm:$0x3]
          %vm441 = vcmask 15360
          %v443 = vsel %vm441, %v439, 0
          %vm445 = vcmask 1041408
          %v447 = vsel %vm445, %v440, 0
          %449 = vmatprep.subr.mxu0 0.0
          %450 = vmatpush1.msra.mxu0 0.0
          %451 = vmatprep.subr.mxu0 0.0
          %452 = vmatpush1.msra.mxu0 0.0
          %453 = vmatprep.subr.mxu0 0.0
          %454 = vmatpush1.msra.mxu0 0.0
          %455 = vmatprep.subr.mxu0 0.0
          %456 = vmatpush1.msra.mxu0 0.0
          %457 = vmatprep.subr.mxu0 0.0
          %458 = vmatpush1.msra.mxu0 0.0
          %459 = vmatprep.subr.mxu0 0.0
          %460 = vmatpush1.msra.mxu0 0.0
          %461 = vmatprep.subr.mxu0 0.0
          %462 = vmatpush1.msra.mxu0 0.0
          %463 = vmatprep.subr.mxu0 0.0
          %464 = vmatpush1.msra.mxu0 0.0
          %465 = vmatprep.subr.mxu0 0.0
          %466 = vmatpush1.msra.mxu0 0.0
          %467 = vmatprep.subr.mxu0 0.0
          %468 = vmatpush1.msra.mxu0 0.0
          %469 = vmatprep.subr.mxu0 0.0
          %470 = vmatpush1.msra.mxu0 0.0
          %471 = vmatprep.subr.mxu0 0.0
          %472 = vmatpush1.msra.mxu0 0.0
          %473 = vmatprep.subr.mxu0 0.0
          %474 = vmatpush1.msra.mxu0 0.0
          %475 = vmatprep.subr.mxu0 0.0
          %476 = vmatpush1.msra.mxu0 0.0
          %477 = vmatprep.subr.mxu0 0.0
          %478 = vmatpush1.msra.mxu0 0.0
          %479 = vmatprep.subr.mxu0 0.0
          %480 = vmatpush1.msra.mxu0 %v447
          %481 = vmatprep.subr.mxu0 0.0
          %482 = vmatpush2.msra.mxu0 0.0
          %483 = vmatprep.subr.mxu0 0.0
          %484 = vmatpush2.msra.mxu0 0.0
          %485 = vmatprep.subr.mxu0 0.0
          %486 = vmatpush2.msra.mxu0 0.0
          %487 = vmatprep.subr.mxu0 0.0
          %488 = vmatpush2.msra.mxu0 0.0
          %489 = vmatprep.subr.mxu0 0.0
          %490 = vmatpush2.msra.mxu0 0.0
          %491 = vmatprep.subr.mxu0 0.0
          %492 = vmatpush2.msra.mxu0 0.0
          %493 = vmatprep.subr.mxu0 0.0
          %494 = vmatpush2.msra.mxu0 0.0
          %495 = vmatprep.subr.mxu0 0.0
          %496 = vmatpush2.msra.mxu0 0.0
          %497 = vmatprep.subr.mxu0 0.0
          %498 = vmatpush2.msra.mxu0 0.0
          %499 = vmatprep.subr.mxu0 0.0
          %500 = vmatpush2.msra.mxu0 0.0
          %501 = vmatprep.subr.mxu0 0.0
          %502 = vmatpush2.msra.mxu0 0.0
          %503 = vmatprep.subr.mxu0 0.0
          %504 = vmatpush2.msra.mxu0 0.0
          %505 = vmatprep.subr.mxu0 0.0
          %506 = vmatpush2.msra.mxu0 0.0
          %507 = vmatprep.subr.mxu0 0.0
          %508 = vmatpush2.msra.mxu0 0.0
          %509 = vmatprep.subr.mxu0 0.0
          %510 = vmatpush2.msra.mxu0 0.0
          %511 = vmatprep.subr.mxu0 0.0
          %512 = vmatpush2.msra.mxu0 0.0
          %513 = vmatprep.mubr.f32.mxu0 0.0
          %514 = vmatmul.mubr.f32.gmra.mxu0 %v443
          %v515 = vpop.f32.mrf.mxu0
          %v516 = vadd.f32 0.0, %v515
          %v517 = vpop.f32.mrf.mxu0
          %518 = vdwg.mxu0
          %vm519 = vcmask 25600
          %520 = vst.msk [vmem:[#allocation4] sm:$0x3] %vm519, %v516
          %v521 = vld [vmem:[#allocation4] sm:$0x1]
          %v522 = vld [vmem:[#allocation4 + $0x1] sm:$0x1]
          %v523 = vadd.f32 %v521, %v522
          %v524 = vxor.u32 %v523, 2147483648
          %v525 = vmul.f32 %v524, 1.442695
          %v526 = vpow.pop %v525
          %v527 = vadd.f32 %v526, 1.0
          %v528 = vrcp.pop %v527
          %v529 = vmul.f32 1.0, %v528
          %530 = vst.msk [vmem:[%s200] sm:$0x1] %vm280, %v529
        $region44: #{tpu_custom_call.1} parent=31 // pred_fallthru
          _
        %s531 = sand.u32 %s110, 1
        %s532 = scalar_lea.sflag [#allocation7], %s531
        %s533 = sand.u32 %s110, 1
        %s534 = scalar_lea.vmem [#allocation8], %s533
        // Predicated region
        $region45: #{tpu_custom_call.1} parent=31 // pred_check
          %p535 = pneg %p120
        $region46: #{tpu_custom_call.1} parent=31 // pred_check_branch
          %537 = sbr.rel (%p535) target = $region48
        $region47: #{tpu_custom_call.1} parent=31 // pred_region
          %s539 = ssub.s32 16, 16
          %540 = vsyncadd %s532, %s539
          %s541 = smul.addr %s24, 16
          %s542 = scalar_lea.hbm %s3, %s541
          %s544 = sshll.u32 %s534, 4
          %s545 = int_to_ptr.vmem [resolvable:$true] %s544
          %547 = dma.vmem_to_hbm [thread:$0]  %s545, 16, %s542, %s532
        $region48: #{tpu_custom_call.1} parent=31 // pred_fallthru
          _
      $region32: #{tpu_custom_call.1} parent=5 // pred_fallthru
        _
      %p548 = scmp.le.s32.totalorder 2, %s15
      // Predicated region
      $region49: #{tpu_custom_call.1} parent=5 // pred_check
        %p549 = pneg %p548
      $region50: #{tpu_custom_call.1} parent=5 // pred_check_branch
        %551 = sbr.rel (%p549) target = $region52
      $region51: #{tpu_custom_call.1} parent=5 // pred_region
        %s552 = ssub.s32 %s15, 2
        // Predicated region
        $region53: #{tpu_custom_call.1} parent=51 // pred_check
          %p553 = pneg %p126
        $region54: #{tpu_custom_call.1} parent=51 // pred_check_branch
          %555 = sbr.rel (%p553) target = $region56
        $region55: #{tpu_custom_call.1} parent=51 // pred_region
          %s556 = sand.u32 %s111, 1
          %s557 = scalar_lea.sflag [#allocation7], %s556
          %s558 = sand.u32 %s111, 1
          %s559 = scalar_lea.vmem [#allocation8], %s558
          %560 = dma.done %s557, 16
        $region56: #{tpu_custom_call.1} parent=51 // pred_fallthru
          _
      $region52: #{tpu_custom_call.1} parent=5 // pred_fallthru
        _
    $region6: #{tpu_custom_call.1} parent=1 // loop_footer
      %s19 = sadd.s32 1, %s15
    $region7: #{tpu_custom_call.1} parent=1 // loop_footer_branch
      %14 = sbr.rel target = $region3
    $region8: #{tpu_custom_call.1} parent=1 // loop_exit
      _
    %561 = vsyncpa [#allocation6], 1
    %s562 = scalar_lea.sflag [#allocation6], 1
    %563 = vsyncpa %s562, 1
    %564 = vsyncpa [#allocation7], 1
    %s565 = scalar_lea.sflag [#allocation7], 1
    %566 = vsyncpa %s565, 1

</llo_original>
